<compile_context>
chip_gen: v5e
topology: v5e:2x2
jax: 0.10.0
libtpu: 0.0.40
codegen_flags: <defaults>
</compile_context>

<pallas_src>
import functools
import math

import jax
import jax.numpy as jnp
from jax import lax
from jax.experimental import pallas as pl
from jax.experimental.pallas import tpu as pltpu

NEG_SLOPE = 0.01   # F.leaky_relu default negative_slope
_NEG_BIG = -1e30   # finite "-inf": safe inside exp / one-hot matmuls


def _global_attn_kernel(q_ref, k_ref, idx_ref, w1t_ref, b_ref, w2f_ref,
                        hmap_ref, hmapt_ref, o_ref, m_ref, l_ref, *, fast):
    """Single-pass flash-style body; grid = (num_n_tiles,)."""
    t = pl.program_id(0)
    last = pl.num_programs(0) - 1

    mxu = jnp.bfloat16 if fast else jnp.float32   # MXU operand dtype (f32 accumulate)

    tn = q_ref.shape[0]
    e = q_ref.shape[1]          # lane-padded emb dim (multiple of 128)
    g = o_ref.shape[0]          # padded number of segments
    h = hmap_ref.shape[1]

    # ---- init resident stats / output accumulator on the first tile -----------
    @pl.when(t == 0)
    def _init():
        m_ref[...] = jnp.full(m_ref.shape, _NEG_BIG, m_ref.dtype)
        l_ref[...] = jnp.zeros(l_ref.shape, l_ref.dtype)
        o_ref[...] = jnp.zeros(o_ref.shape, o_ref.dtype)

    # ---- attention logits for this tile ----------------------------------------
    k_f32 = k_ref[...]                                              # [TN, E] f32 (v = k)
    # w1(cat([q, k], dim=1)): two K=E pushes accumulate into one f32 result.
    x = (jnp.dot(q_ref[...], w1t_ref[:e, :], preferred_element_type=jnp.float32)
         + jnp.dot(k_f32.astype(mxu), w1t_ref[e:, :],
                   preferred_element_type=jnp.float32)
         + b_ref[...])                                              # [TN, E] f32
    x = jnp.where(x >= 0, x, NEG_SLOPE * x)                         # leaky_relu (VPU, f32)

    # einsum('nhc,hc->nh', x.view(TN,H,D), w2) == (x * w2_flat) @ head_map
    attn = jnp.dot((x * w2f_ref[...]).astype(mxu), hmap_ref[...],
                   preferred_element_type=jnp.float32)              # [TN, H] f32

    idx = idx_ref[...]                                              # [TN, 1] int32 (-1 => pad row)
    onehot = idx == lax.broadcasted_iota(jnp.int32, (tn, g), 1)     # [TN, G] bool
    onehot_f = onehot.astype(jnp.float32)                           # exact 0/1
    onehot_c = onehot.astype(mxu) if fast else onehot_f
    neg_mask = jnp.where(onehot, 0.0, _NEG_BIG)                     # built once, reused per head

    # ---- online per-segment max / rescaled sum ----------------------------------
    m_old = m_ref[...]                                              # [H, G] f32
    tile_max = jnp.concatenate(
        [jnp.max(attn[:, hh:hh + 1] + neg_mask, axis=0, keepdims=True)
         for hh in range(h)], axis=0)                               # [H, G] f32 (XLU reductions)
    m_new = jnp.maximum(m_old, tile_max)
    alpha = jnp.exp(m_old - m_new)                                  # in (0, 1]

    # Gather each row's running segment max (tiny K=G matmul, kept f32).
    em = lax.dot_general(onehot_f, m_new, (((1,), (1,)), ((), ())),
                         preferred_element_type=jnp.float32)        # [TN, H]
    p = jnp.exp(attn - em)                                          # [TN, H] f32, <= 1 for real rows
    tile_sum = lax.dot_general(p, onehot_f, (((0,), (0,)), ((), ())),
                               preferred_element_type=jnp.float32)  # [H, G]
    l_ref[...] = l_ref[...] * alpha + tile_sum
    m_ref[...] = m_new

    # ---- flash-style unnormalized output accumulation ---------------------------
    hmapt = hmapt_ref[...]                                          # [H, E] f32 head map^T
    alpha_full = lax.dot_general(alpha, hmapt, (((0,), (0,)), ((), ())),
                                 preferred_element_type=jnp.float32)  # [G, E]
    wfull = jnp.dot(p, hmapt, preferred_element_type=jnp.float32)     # [TN, E] per-lane weights
    out_elem = wfull * k_f32                                          # [TN, E] f32
    out_c = out_elem.astype(mxu) if fast else out_elem
    # scatter(out_elem, index, reduce='sum'): contract the row axis with the one-hot.
    contrib = lax.dot_general(onehot_c, out_c, (((0,), (0,)), ((), ())),
                              preferred_element_type=jnp.float32)     # [G, E]
    o_ref[...] = o_ref[...] * alpha_full + contrib

    # ---- finalize: normalize by the per-segment, per-head sums -------------------
    @pl.when(t == last)
    def _finalize():
        if fast:
            inv_l = pl.reciprocal(l_ref[...] + 1e-16, approx=True)   # EUP slot
        else:
            inv_l = 1.0 / (l_ref[...] + 1e-16)                       # [H, G]
        inv_full = lax.dot_general(inv_l, hmapt, (((0,), (0,)), ((), ())),
                                   preferred_element_type=jnp.float32)  # [G, E]
        o_ref[...] = o_ref[...] * inv_full


def _round_up(x, m):
    return ((x + m - 1) // m) * m


def _vmem_limit_bytes():
    """Raise the scoped VMEM limit toward the physical capacity, with headroom."""
    try:
        cap = int(pltpu.get_tpu_info().vmem_capacity_bytes)   # 128 MiB v5e/v6e, 64 MiB v7x
    except Exception:
        cap = 64 << 20
    return max(min(cap - (16 << 20), 112 << 20), 32 << 20)


def _pick_tile_n(n, e_pad, g_pad, h, resident_bytes, fast, vmem_limit):
    """Largest sublane-aligned N tile whose working set (residents + double-
    buffered q/k/idx tiles + f32 intermediates, counting lane padding) fits."""
    del n, h
    q_bytes = e_pad * (2 if fast else 4)
    g_lane = max(_round_up(g_pad, 128), 128)          # [TN, G] arrays pad to 128 lanes
    per_row = 2 * (q_bytes + 4 * e_pad + 4 * 128)     # q, k, idx  x  2 pipeline buffers
    per_row += 3 * 4 * e_pad                          # x / wfull / out_elem (f32)
    per_row += 3 * 4 * g_lane                         # one-hot / neg_mask live copies
    per_row += 3 * 4 * 128                            # [TN, H] logits / exp terms
    budget = max(vmem_limit - resident_bytes - (4 << 20), 1 << 20)
    tn = int(budget // per_row)
    tn = min(tn, 2048)                                # diminishing returns past ~1-2K rows
    return max(8, (tn // 8) * 8)


def global_attn(q, k, index, dim_size, w1, b1, w2, *, tile_n=None, fast=True):
    """Pallas implementation of GlobalAttn.forward(q, k, index, dim_size)."""
    n, e = q.shape
    h, d = w2.shape
    assert h * d == e
    g = int(dim_size)

    e_pad = _round_up(e, 128)       # lane-dense q/k tiles and [G, E] output block
    g_pad = _round_up(g, 8)
    mxu_bytes = 2 if fast else 4

    resident = (g_pad * e_pad * 4                    # resident output accumulator
                + 2 * e_pad * e_pad * mxu_bytes      # W1^T
                + e_pad * h * mxu_bytes              # head map
                + h * e_pad * 4                      # head map^T (f32)
                + 2 * e_pad * 4                      # bias, flattened w2
                + 2 * h * g_pad * 4)                 # m / l scratch

    vmem_limit = _vmem_limit_bytes()
    if tile_n is None:
        tile_n = _pick_tile_n(n, e_pad, g_pad, h, resident, fast, vmem_limit)
    tile_n = int(tile_n)
    if tile_n >= n:
        tile_n = _round_up(n, 8)                     # single tile
    else:
        tile_n = max(8, (tile_n // 8) * 8)           # sublane-aligned tile
    n_pad = _round_up(n, tile_n)
    n_tiles = n_pad // tile_n

    # ---- pad inputs: zero rows/cols; padded rows get segment id -1 (zero one-hot)
    q_p = jnp.pad(q, ((0, n_pad - n), (0, e_pad - e)))
    k_p = jnp.pad(k, ((0, n_pad - n), (0, e_pad - e)))
    idx_col = jnp.pad(index.astype(jnp.int32), (0, n_pad - n),
                      constant_values=-1).reshape(n_pad, 1)

    # ---- resident operands (constant index maps -> DMA'd once, stay in VMEM) ----
    w1t = w1.T                                                   # [2E, E]
    w1t_full = jnp.zeros((2 * e_pad, e_pad), jnp.float32)
    w1t_full = w1t_full.at[:e, :e].set(w1t[:e])                  # q-feature rows
    w1t_full = w1t_full.at[e_pad:e_pad + e, :e].set(w1t[e:])     # k-feature rows
    b_full = jnp.zeros((1, e_pad), jnp.float32).at[0, :e].set(b1)
    w2f_full = jnp.zeros((1, e_pad), jnp.float32).at[0, :e].set(w2.reshape(e))
    head_of_lane = jnp.arange(e_pad) // d                        # >= h on padded lanes -> zero row
    hmap = (head_of_lane[:, None] == jnp.arange(h)[None, :]).astype(jnp.float32)  # [E_pad, H]
    hmap_t = hmap.T                                              # [H, E_pad] kept f32

    if fast:   # pre-cast MXU-only operands once in the wrapper (halves their DMA/VMEM)
        q_p = q_p.astype(jnp.bfloat16)
        w1t_in = w1t_full.astype(jnp.bfloat16)
        hmap_in = hmap.astype(jnp.bfloat16)
    else:
        w1t_in, hmap_in = w1t_full, hmap

    def row_spec(shape):
        return pl.BlockSpec(shape, lambda t: (t, 0))

    def fixed_spec(shape):
        return pl.BlockSpec(shape, lambda t: (0, 0))             # resident block

    kernel = functools.partial(_global_attn_kernel, fast=fast)
    out = pl.pallas_call(
        kernel,
        out_shape=jax.ShapeDtypeStruct((g_pad, e_pad), jnp.float32),
        grid=(n_tiles,),
        in_specs=[
            row_spec((tile_n, e_pad)),        # q (bf16 when fast)
            row_spec((tile_n, e_pad)),        # k (= v), f32
            row_spec((tile_n, 1)),            # segment index column
            fixed_spec((2 * e_pad, e_pad)),   # W1^T
            fixed_spec((1, e_pad)),           # bias
            fixed_spec((1, e_pad)),           # w2 (flattened per-head weights)
            fixed_spec((e_pad, h)),           # head map
            fixed_spec((h, e_pad)),           # head map transpose (f32)
        ],
        out_specs=fixed_spec((g_pad, e_pad)),                    # resident accumulator
        scratch_shapes=[pltpu.VMEM((h, g_pad), jnp.float32),     # running per-segment max
                        pltpu.VMEM((h, g_pad), jnp.float32)],    # running per-segment sum
        compiler_params=pltpu.CompilerParams(
            # The single N-tile axis carries the stats/output accumulators -> serial.
            dimension_semantics=("arbitrary",),
            vmem_limit_bytes=int(vmem_limit)),
    )(q_p, k_p, idx_col, w1t_in, b_full, w2f_full, hmap_in, hmap_t)

    return out[:g, :e]


def global_attn_ref(q, k, index, dim_size, w1, b1, w2):
    """Pure-JAX reference matching the PyTorch module semantics."""
    n, e = q.shape
    h, d = w2.shape
    x = jnp.concatenate([q, k], axis=1) @ w1.T + b1
    x = jnp.where(x >= 0, x, NEG_SLOPE * x).reshape(n, h, d)
    attn = jnp.einsum('nhc,hc->nh', x, w2)
    seg_max = jax.ops.segment_max(attn, index, num_segments=dim_size)
    exp_attn = jnp.exp(attn - seg_max[index])
    seg_sum = jax.ops.segment_sum(exp_attn, index, num_segments=dim_size)
    w = exp_attn / (seg_sum[index] + 1e-16)
    out = (w[:, :, None] * k.reshape(n, h, d)).reshape(n, e)
    return jax.ops.segment_sum(out, index, num_segments=dim_size)


if __name__ == "__main__":
    E, H = 32, 4          # emb_dim, num_heads
    D = E // H            # head_dim
    N, G = 90, 8          # number of elements, dim_size (number of segments)
    TILE_N = 32           # 3 N-tiles (last one padded) to exercise the online rescale

    key = jax.random.PRNGKey(0)
    k1, k2, k3, k4, k5, k6 = jax.random.split(key, 6)

    def xavier(k_, shape, fan_in, fan_out, gain):
        bound = gain * math.sqrt(6.0 / (fan_in + fan_out))
        return jax.random.uniform(k_, shape, jnp.float32, -bound, bound)

    gain = 1.0 / math.sqrt(2.0)
    w1 = xavier(k1, (E, 2 * E), 2 * E, E, gain)          # nn.Linear(2E, E).weight
    b_bound = 1.0 / math.sqrt(2 * E)
    b1 = jax.random.uniform(k2, (E,), jnp.float32, -b_bound, b_bound)
    w2 = xavier(k3, (H, D), D, H, gain)                  # nn.Parameter(H, D)

    q = jax.random.normal(k4, (N, E), jnp.float32)
    k_in = jax.random.normal(k5, (N, E), jnp.float32)
    index = jax.random.randint(k6, (N,), 0, G, jnp.int32)

    ref = global_attn_ref(q, k_in, index, G, w1, b1, w2)

    # Exact path (f32 MXU operands), multi-tile to exercise the flash rescale.
    out = jax.block_until_ready(
        global_attn(q, k_in, index, G, w1, b1, w2, tile_n=TILE_N, fast=False))
    assert out.shape == (G, E)
    assert jnp.allclose(out, ref, atol=5e-4, rtol=5e-4), "f32 kernel mismatch"

    # Fast path (bf16 MXU operands, f32 accumulation, approx reciprocal), auto tile.
    out_fast = jax.block_until_ready(
        global_attn(q, k_in, index, G, w1, b1, w2, fast=True))
    assert out_fast.shape == (G, E)
    assert jnp.allclose(out_fast, ref, atol=5e-2, rtol=5e-2), "bf16 kernel mismatch"

    print("KERNEL_OK")
</pallas_src>

<mosaic_0001>
module attributes {stable_mosaic.version = 11 : i64} {
  func.func @_global_attn_kernel(%arg0: i32, %arg1: memref<32x128xf32, #tpu.memory_space<vmem>>, %arg2: memref<32x128xf32, #tpu.memory_space<vmem>>, %arg3: memref<32x1xi32, #tpu.memory_space<vmem>>, %arg4: memref<256x128xf32, #tpu.memory_space<vmem>>, %arg5: memref<1x128xf32, #tpu.memory_space<vmem>>, %arg6: memref<1x128xf32, #tpu.memory_space<vmem>>, %arg7: memref<128x4xf32, #tpu.memory_space<vmem>>, %arg8: memref<4x128xf32, #tpu.memory_space<vmem>>, %arg9: memref<8x128xf32, #tpu.memory_space<vmem>>, %arg10: memref<4x8xf32, #tpu.memory_space<vmem>>, %arg11: memref<4x8xf32, #tpu.memory_space<vmem>>) attributes {dimension_semantics = [#tpu.dimension_semantics<arbitrary>], iteration_bounds = array<i64: 3>, scalar_prefetch = 0 : i64, scratch_operands = 2 : i64, tpu.core_type = #tpu.core_type<tc>, window_params = [{transform_indices = @transform_0, window_bounds = array<i64: 32, 128>}, {transform_indices = @transform_1, window_bounds = array<i64: 32, 128>}, {transform_indices = @transform_2, window_bounds = array<i64: 32, 1>}, {pipeline_mode = #tpu.pipeline_mode<synchronous>, transform_indices = @transform_3, window_bounds = array<i64: 256, 128>}, {pipeline_mode = #tpu.pipeline_mode<synchronous>, transform_indices = @transform_4, window_bounds = array<i64: 1, 128>}, {pipeline_mode = #tpu.pipeline_mode<synchronous>, transform_indices = @transform_5, window_bounds = array<i64: 1, 128>}, {pipeline_mode = #tpu.pipeline_mode<synchronous>, transform_indices = @transform_6, window_bounds = array<i64: 128, 4>}, {pipeline_mode = #tpu.pipeline_mode<synchronous>, transform_indices = @transform_7, window_bounds = array<i64: 4, 128>}, {pipeline_mode = #tpu.pipeline_mode<synchronous>, transform_indices = @transform_8, window_bounds = array<i64: 8, 128>}]} {
    %c0_i32 = arith.constant 0 : i32
    %0 = arith.cmpi eq, %arg0, %c0_i32 : i32
    %1 = arith.extui %0 : i1 to i32
    %c0_i32_0 = arith.constant 0 : i32
    %2 = arith.cmpi ne, %1, %c0_i32_0 : i32
    scf.if %2 {
      %cst_45 = arith.constant -1.000000e+30 : f32
      %78 = vector.broadcast %cst_45 : f32 to vector<4x8xf32>
      %c0_46 = arith.constant 0 : index
      %c0_47 = arith.constant 0 : index
      %79 = vector.load %arg10[%c0_46, %c0_47] : memref<4x8xf32, #tpu.memory_space<vmem>>, vector<4x8xf32>
      tpu.vector_store %arg10[%c0_46, %c0_47], %78 {strides = array<i32>} : memref<4x8xf32, #tpu.memory_space<vmem>>, vector<4x8xf32>,
      %cst_48 = arith.constant 0.000000e+00 : f32
      %80 = vector.broadcast %cst_48 : f32 to vector<4x8xf32>
      %c0_49 = arith.constant 0 : index
      %c0_50 = arith.constant 0 : index
      %81 = vector.load %arg11[%c0_49, %c0_50] : memref<4x8xf32, #tpu.memory_space<vmem>>, vector<4x8xf32>
      tpu.vector_store %arg11[%c0_49, %c0_50], %80 {strides = array<i32>} : memref<4x8xf32, #tpu.memory_space<vmem>>, vector<4x8xf32>,
      %cst_51 = arith.constant 0.000000e+00 : f32
      %82 = vector.broadcast %cst_51 : f32 to vector<8x128xf32>
      %c0_52 = arith.constant 0 : index
      %c0_53 = arith.constant 0 : index
      %83 = vector.load %arg9[%c0_52, %c0_53] : memref<8x128xf32, #tpu.memory_space<vmem>>, vector<8x128xf32>
      tpu.vector_store %arg9[%c0_52, %c0_53], %82 {strides = array<i32>} : memref<8x128xf32, #tpu.memory_space<vmem>>, vector<8x128xf32>,
    } else {
    }
    %c0 = arith.constant 0 : index
    %c0_1 = arith.constant 0 : index
    %3 = vector.load %arg2[%c0, %c0_1] : memref<32x128xf32, #tpu.memory_space<vmem>>, vector<32x128xf32>
    %c0_2 = arith.constant 0 : index
    %c0_3 = arith.constant 0 : index
    %4 = vector.load %arg1[%c0_2, %c0_3] : memref<32x128xf32, #tpu.memory_space<vmem>>, vector<32x128xf32>
    %c0_4 = arith.constant 0 : index
    %c0_5 = arith.constant 0 : index
    %5 = vector.load %arg4[%c0_4, %c0_5] : memref<256x128xf32, #tpu.memory_space<vmem>>, vector<128x128xf32>
    %cst = arith.constant dense<0.000000e+00> : vector<32x128xf32>
    %6 = tpu.matmul %4, %5, %cst {dimension_numbers = #tpu.dot_dimension_numbers<[1], [0], [0], [1], [0, 0, 1, 1], [], []>} : vector<32x128xf32>, vector<128x128xf32>, vector<32x128xf32> -> vector<32x128xf32>
    %c128 = arith.constant 128 : index
    %c0_6 = arith.constant 0 : index
    %7 = vector.load %arg4[%c128, %c0_6] : memref<256x128xf32, #tpu.memory_space<vmem>>, vector<128x128xf32>
    %cst_7 = arith.constant dense<0.000000e+00> : vector<32x128xf32>
    %8 = tpu.matmul %3, %7, %cst_7 {dimension_numbers = #tpu.dot_dimension_numbers<[1], [0], [0], [1], [0, 0, 1, 1], [], []>} : vector<32x128xf32>, vector<128x128xf32>, vector<32x128xf32> -> vector<32x128xf32>
    %9 = arith.addf %6, %8 : vector<32x128xf32>
    %c0_8 = arith.constant 0 : index
    %c0_9 = arith.constant 0 : index
    %10 = vector.load %arg5[%c0_8, %c0_9] : memref<1x128xf32, #tpu.memory_space<vmem>>, vector<1x128xf32>
    %11 = vector.broadcast %10 : vector<1x128xf32> to vector<32x128xf32>
    %12 = arith.addf %9, %11 : vector<32x128xf32>
    %cst_10 = arith.constant 0.000000e+00 : f32
    %13 = vector.broadcast %cst_10 : f32 to vector<32x128xf32>
    %14 = arith.cmpf oge, %12, %13 : vector<32x128xf32>
    %cst_11 = arith.constant 0.00999999977 : f32
    %15 = vector.broadcast %cst_11 : f32 to vector<32x128xf32>
    %16 = arith.mulf %15, %12 : vector<32x128xf32>
    %17 = arith.select %14, %12, %16 : vector<32x128xi1>, vector<32x128xf32>
    %c0_12 = arith.constant 0 : index
    %c0_13 = arith.constant 0 : index
    %18 = vector.load %arg6[%c0_12, %c0_13] : memref<1x128xf32, #tpu.memory_space<vmem>>, vector<1x128xf32>
    %19 = vector.broadcast %18 : vector<1x128xf32> to vector<32x128xf32>
    %20 = arith.mulf %17, %19 : vector<32x128xf32>
    %c0_14 = arith.constant 0 : index
    %c0_15 = arith.constant 0 : index
    %21 = vector.load %arg7[%c0_14, %c0_15] : memref<128x4xf32, #tpu.memory_space<vmem>>, vector<128x4xf32>
    %cst_16 = arith.constant dense<0.000000e+00> : vector<32x4xf32>
    %22 = tpu.matmul %20, %21, %cst_16 {dimension_numbers = #tpu.dot_dimension_numbers<[1], [0], [0], [1], [0, 0, 1, 1], [], []>} : vector<32x128xf32>, vector<128x4xf32>, vector<32x4xf32> -> vector<32x4xf32>
    %c0_17 = arith.constant 0 : index
    %c0_18 = arith.constant 0 : index
    %23 = vector.load %arg3[%c0_17, %c0_18] : memref<32x1xi32, #tpu.memory_space<vmem>>, vector<32x1xi32>
    %24 = tpu.iota {dimensions = array<i32: 1>} : vector<32x8xi32>
    %25 = vector.broadcast %23 : vector<32x1xi32> to vector<32x8xi32>
    %26 = arith.cmpi eq, %25, %24 : vector<32x8xi32>
    %27 = arith.extui %26 : vector<32x8xi1> to vector<32x8xi32>
    %28 = arith.sitofp %27 : vector<32x8xi32> to vector<32x8xf32>
    %cst_19 = arith.constant 0.000000e+00 : f32
    %cst_20 = arith.constant -1.000000e+30 : f32
    %29 = vector.broadcast %cst_19 : f32 to vector<32x8xf32>
    %30 = vector.broadcast %cst_20 : f32 to vector<32x8xf32>
    %31 = arith.select %26, %29, %30 : vector<32x8xi1>, vector<32x8xf32>
    %c0_21 = arith.constant 0 : index
    %c0_22 = arith.constant 0 : index
    %32 = vector.load %arg10[%c0_21, %c0_22] : memref<4x8xf32, #tpu.memory_space<vmem>>, vector<4x8xf32>
    %33 = vector.extract_strided_slice %22 {offsets = [0, 0], sizes = [32, 1], strides = [1, 1]} : vector<32x4xf32> to vector<32x1xf32>
    %34 = vector.broadcast %33 : vector<32x1xf32> to vector<32x8xf32>
    %35 = arith.addf %34, %31 : vector<32x8xf32>
    %cst_23 = arith.constant dense<0xFF800000> : vector<8xf32>
    %36 = vector.multi_reduction <maximumf>, %35, %cst_23 [0] : vector<32x8xf32> to vector<8xf32>
    %37 = vector.shape_cast %36 : vector<8xf32> to vector<1x8xf32>
    %38 = vector.extract_strided_slice %22 {offsets = [0, 1], sizes = [32, 1], strides = [1, 1]} : vector<32x4xf32> to vector<32x1xf32>
    %39 = vector.broadcast %38 : vector<32x1xf32> to vector<32x8xf32>
    %40 = arith.addf %39, %31 : vector<32x8xf32>
    %cst_24 = arith.constant dense<0xFF800000> : vector<8xf32>
    %41 = vector.multi_reduction <maximumf>, %40, %cst_24 [0] : vector<32x8xf32> to vector<8xf32>
    %42 = vector.shape_cast %41 : vector<8xf32> to vector<1x8xf32>
    %43 = vector.extract_strided_slice %22 {offsets = [0, 2], sizes = [32, 1], strides = [1, 1]} : vector<32x4xf32> to vector<32x1xf32>
    %44 = vector.broadcast %43 : vector<32x1xf32> to vector<32x8xf32>
    %45 = arith.addf %44, %31 : vector<32x8xf32>
    %cst_25 = arith.constant dense<0xFF800000> : vector<8xf32>
    %46 = vector.multi_reduction <maximumf>, %45, %cst_25 [0] : vector<32x8xf32> to vector<8xf32>
    %47 = vector.shape_cast %46 : vector<8xf32> to vector<1x8xf32>
    %48 = vector.extract_strided_slice %22 {offsets = [0, 3], sizes = [32, 1], strides = [1, 1]} : vector<32x4xf32> to vector<32x1xf32>
    %49 = vector.broadcast %48 : vector<32x1xf32> to vector<32x8xf32>
    %50 = arith.addf %49, %31 : vector<32x8xf32>
    %cst_26 = arith.constant dense<0xFF800000> : vector<8xf32>
    %51 = vector.multi_reduction <maximumf>, %50, %cst_26 [0] : vector<32x8xf32> to vector<8xf32>
    %52 = vector.shape_cast %51 : vector<8xf32> to vector<1x8xf32>
    %53 = tpu.concatenate %37, %42, %47, %52 in 0 : vector<1x8xf32>, vector<1x8xf32>, vector<1x8xf32>, vector<1x8xf32> -> vector<4x8xf32>
    %54 = arith.maximumf %32, %53 : vector<4x8xf32>
    %55 = arith.subf %32, %54 : vector<4x8xf32>
    %56 = math.exp %55 : vector<4x8xf32>
    %cst_27 = arith.constant dense<0.000000e+00> : vector<32x4xf32>
    %57 = tpu.matmul %28, %54, %cst_27 {dimension_numbers = #tpu.dot_dimension_numbers<[1], [1], [0], [0], [0, 0, 1, 0], [], []>} : vector<32x8xf32>, vector<4x8xf32>, vector<32x4xf32> -> vector<32x4xf32>
    %58 = arith.subf %22, %57 : vector<32x4xf32>
    %59 = math.exp %58 : vector<32x4xf32>
    %cst_28 = arith.constant dense<0.000000e+00> : vector<4x8xf32>
    %60 = tpu.matmul %59, %28, %cst_28 {dimension_numbers = #tpu.dot_dimension_numbers<[0], [0], [1], [1], [0, 1, 1, 1], [], []>} : vector<32x4xf32>, vector<32x8xf32>, vector<4x8xf32> -> vector<4x8xf32>
    %c0_29 = arith.constant 0 : index
    %c0_30 = arith.constant 0 : index
    %61 = vector.load %arg11[%c0_29, %c0_30] : memref<4x8xf32, #tpu.memory_space<vmem>>, vector<4x8xf32>
    %62 = arith.mulf %61, %56 : vector<4x8xf32>
    %63 = arith.addf %62, %60 : vector<4x8xf32>
    %c0_31 = arith.constant 0 : index
    %c0_32 = arith.constant 0 : index
    %64 = vector.load %arg11[%c0_31, %c0_32] : memref<4x8xf32, #tpu.memory_space<vmem>>, vector<4x8xf32>
    tpu.vector_store %arg11[%c0_31, %c0_32], %63 {strides = array<i32>} : memref<4x8xf32, #tpu.memory_space<vmem>>, vector<4x8xf32>,
    %c0_33 = arith.constant 0 : index
    %c0_34 = arith.constant 0 : index
    %65 = vector.load %arg10[%c0_33, %c0_34] : memref<4x8xf32, #tpu.memory_space<vmem>>, vector<4x8xf32>
    tpu.vector_store %arg10[%c0_33, %c0_34], %54 {strides = array<i32>} : memref<4x8xf32, #tpu.memory_space<vmem>>, vector<4x8xf32>,
    %c0_35 = arith.constant 0 : index
    %c0_36 = arith.constant 0 : index
    %66 = vector.load %arg8[%c0_35, %c0_36] : memref<4x128xf32, #tpu.memory_space<vmem>>, vector<4x128xf32>
    %cst_37 = arith.constant dense<0.000000e+00> : vector<8x128xf32>
    %67 = tpu.matmul %56, %66, %cst_37 {dimension_numbers = #tpu.dot_dimension_numbers<[0], [0], [1], [1], [0, 1, 1, 1], [], []>} : vector<4x8xf32>, vector<4x128xf32>, vector<8x128xf32> -> vector<8x128xf32>
    %cst_38 = arith.constant dense<0.000000e+00> : vector<32x128xf32>
    %68 = tpu.matmul %59, %66, %cst_38 {dimension_numbers = #tpu.dot_dimension_numbers<[1], [0], [0], [1], [0, 0, 1, 1], [], []>} : vector<32x4xf32>, vector<4x128xf32>, vector<32x128xf32> -> vector<32x128xf32>
    %69 = arith.mulf %68, %3 : vector<32x128xf32>
    %cst_39 = arith.constant dense<0.000000e+00> : vector<8x128xf32>
    %70 = tpu.matmul %28, %69, %cst_39 {dimension_numbers = #tpu.dot_dimension_numbers<[0], [0], [1], [1], [0, 1, 1, 1], [], []>} : vector<32x8xf32>, vector<32x128xf32>, vector<8x128xf32> -> vector<8x128xf32>
    %c0_40 = arith.constant 0 : index
    %c0_41 = arith.constant 0 : index
    %71 = vector.load %arg9[%c0_40, %c0_41] : memref<8x128xf32, #tpu.memory_space<vmem>>, vector<8x128xf32>
    %72 = arith.mulf %71, %67 : vector<8x128xf32>
    %73 = arith.addf %72, %70 : vector<8x128xf32>
    %c0_42 = arith.constant 0 : index
    %c0_43 = arith.constant 0 : index
    %74 = vector.load %arg9[%c0_42, %c0_43] : memref<8x128xf32, #tpu.memory_space<vmem>>, vector<8x128xf32>
    tpu.vector_store %arg9[%c0_42, %c0_43], %73 {strides = array<i32>} : memref<8x128xf32, #tpu.memory_space<vmem>>, vector<8x128xf32>,
    %c2_i32 = arith.constant 2 : i32
    %75 = arith.cmpi eq, %arg0, %c2_i32 : i32
    %76 = arith.extui %75 : i1 to i32
    %c0_i32_44 = arith.constant 0 : i32
    %77 = arith.cmpi ne, %76, %c0_i32_44 : i32
    scf.if %77 {
      %c0_45 = arith.constant 0 : index
      %c0_46 = arith.constant 0 : index
      %78 = vector.load %arg11[%c0_45, %c0_46] : memref<4x8xf32, #tpu.memory_space<vmem>>, vector<4x8xf32>
      %cst_47 = arith.constant 1.000000e-16 : f32
      %79 = vector.broadcast %cst_47 : f32 to vector<4x8xf32>
      %80 = arith.addf %78, %79 : vector<4x8xf32>
      %cst_48 = arith.constant 1.000000e+00 : f32
      %81 = vector.broadcast %cst_48 : f32 to vector<4x8xf32>
      %82 = arith.divf %81, %80 : vector<4x8xf32>
      %cst_49 = arith.constant dense<0.000000e+00> : vector<8x128xf32>
      %83 = tpu.matmul %82, %66, %cst_49 {dimension_numbers = #tpu.dot_dimension_numbers<[0], [0], [1], [1], [0, 1, 1, 1], [], []>} : vector<4x8xf32>, vector<4x128xf32>, vector<8x128xf32> -> vector<8x128xf32>
      %c0_50 = arith.constant 0 : index
      %c0_51 = arith.constant 0 : index
      %84 = vector.load %arg9[%c0_50, %c0_51] : memref<8x128xf32, #tpu.memory_space<vmem>>, vector<8x128xf32>
      %85 = arith.mulf %84, %83 : vector<8x128xf32>
      %c0_52 = arith.constant 0 : index
      %c0_53 = arith.constant 0 : index
      %86 = vector.load %arg9[%c0_52, %c0_53] : memref<8x128xf32, #tpu.memory_space<vmem>>, vector<8x128xf32>
      tpu.vector_store %arg9[%c0_52, %c0_53], %85 {strides = array<i32>} : memref<8x128xf32, #tpu.memory_space<vmem>>, vector<8x128xf32>,
    } else {
    }
    return
  }
  func.func @transform_0(%arg0: i32) -> (i32, i32) {
    %c0_i32 = arith.constant 0 : i32
    %c0_i32_0 = arith.constant 0 : i32
    return %arg0, %c0_i32 : i32, i32
  }
  func.func @transform_1(%arg0: i32) -> (i32, i32) {
    %c0_i32 = arith.constant 0 : i32
    %c0_i32_0 = arith.constant 0 : i32
    return %arg0, %c0_i32 : i32, i32
  }
  func.func @transform_2(%arg0: i32) -> (i32, i32) {
    %c0_i32 = arith.constant 0 : i32
    %c0_i32_0 = arith.constant 0 : i32
    return %arg0, %c0_i32 : i32, i32
  }
  func.func @transform_3(%arg0: i32) -> (i32, i32) {
    %c0_i32 = arith.constant 0 : i32
    %c0_i32_0 = arith.constant 0 : i32
    %c0_i32_1 = arith.constant 0 : i32
    return %c0_i32, %c0_i32_0 : i32, i32
  }
  func.func @transform_4(%arg0: i32) -> (i32, i32) {
    %c0_i32 = arith.constant 0 : i32
    %c0_i32_0 = arith.constant 0 : i32
    %c0_i32_1 = arith.constant 0 : i32
    return %c0_i32, %c0_i32_0 : i32, i32
  }
  func.func @transform_5(%arg0: i32) -> (i32, i32) {
    %c0_i32 = arith.constant 0 : i32
    %c0_i32_0 = arith.constant 0 : i32
    %c0_i32_1 = arith.constant 0 : i32
    return %c0_i32, %c0_i32_0 : i32, i32
  }
  func.func @transform_6(%arg0: i32) -> (i32, i32) {
    %c0_i32 = arith.constant 0 : i32
    %c0_i32_0 = arith.constant 0 : i32
    %c0_i32_1 = arith.constant 0 : i32
    return %c0_i32, %c0_i32_0 : i32, i32
  }
  func.func @transform_7(%arg0: i32) -> (i32, i32) {
    %c0_i32 = arith.constant 0 : i32
    %c0_i32_0 = arith.constant 0 : i32
    %c0_i32_1 = arith.constant 0 : i32
    return %c0_i32, %c0_i32_0 : i32, i32
  }
  func.func @transform_8(%arg0: i32) -> (i32, i32) {
    %c0_i32 = arith.constant 0 : i32
    %c0_i32_0 = arith.constant 0 : i32
    %c0_i32_1 = arith.constant 0 : i32
    return %c0_i32, %c0_i32_0 : i32, i32
  }
}

</mosaic_0001>

<llo_original>
// kernel: tpu_custom_call.1
$region0: #{tpu_custom_call.1}
  #allocation0 [shape = 'u32[]', space=smem, size = 0x4, offset = 0x4, fixed_abs, tag = 'smem constant byte address 0x4 - core index']
  #allocation1 [shape = 'u32[72,128]{1,0:T(1,128)}', space=vmem, size = 0x9000, scoped, tag = 'internal scratch']
  #allocation2 [shape = 'f32[4,8]{1,0:T(4,128)}', space=vmem, size = 0x800, scoped, tag = 'scratch operand']
  #allocation3 [shape = 'f32[4,8]{1,0:T(4,128)}', space=vmem, size = 0x800, scoped, tag = 'scratch operand']
  %s0 = inlined_call_operand.vmem [shape: f32[96,128], index: 0, kind: input, shape index: {}]
  %s1 = inlined_call_operand.vmem [shape: f32[96,128], index: 1, kind: input, shape index: {}]
  %s2 = inlined_call_operand.vmem [shape: s32[96,1], index: 2, kind: input, shape index: {}]
  %s3 = inlined_call_operand.hbm [shape: f32[256,128], index: 3, kind: input, shape index: {}]
  %s4 = inlined_call_operand.vmem [shape: f32[1,128], index: 4, kind: input, shape index: {}]
  %s5 = inlined_call_operand.vmem [shape: f32[1,128], index: 5, kind: input, shape index: {}]
  %s6 = inlined_call_operand.vmem [shape: f32[128,4], index: 6, kind: input, shape index: {}]
  %s7 = inlined_call_operand.vmem [shape: f32[4,128], index: 7, kind: input, shape index: {}]
  %s8 = inlined_call_operand.hbm [shape: f32[8,128], index: 8, kind: output, shape index: {}]
  %s9 = sld [smem:[#allocation0]]
  $region77: #{tpu_custom_call.1} parent=0
    _
  %s11 = ssub.s32 1, %s9
  %s12 = scalar_select 0, %s11, %s9
  $region1: #{tpu_custom_call.1} parent=0
    #allocation4 [shape = 'u8[131072]{0}', space=vmem, size = 0x20000, scoped, tag = 'input window, operand 3, single buffered']
    #allocation5 [shape = 's32[2]{0}', space=sflag, size = 0x8, scoped, tag = 'scoped memory for tpu_custom_call.1']
    #allocation6 [shape = 's32[2]{0}', space=sflag, size = 0x8, scoped, tag = 'scoped memory for tpu_custom_call.1']
    #allocation7 [shape = 'u8[4096]{0}', space=vmem, size = 0x1000, scoped, tag = 'output window, operand 0, single buffered']
    %13 = vsyncpa [#allocation5], 0
    %14 = vsyncpa [#allocation6], 0
    loop: start=0, step=1, limit=5
    $region2: #{tpu_custom_call.1} parent=1 // loop_pre_header
      _
    $region3: #{tpu_custom_call.1} parent=1 // loop_header
      %s16 = sphi 0, %s20
      %p17 = scmp.ge.s32.totalorder %s16, 5
      %s26 = sphi 0, %s28
      %s29 = sphi 0, %s26
      %s30 = sphi 0, %s29
      %s46 = sphi 0, %s30
      %s52 = sphi 0, %s54
      %s55 = sphi 0, %s52
      %s56 = sphi 0, %s55
      %s72 = sphi 0, %s56
      %s78 = sphi 0, %s80
      %s81 = sphi 0, %s78
      %s82 = sphi 0, %s81
      %s98 = sphi 0, %s82
      %s102 = sphi 0, %s102
      %s104 = sphi 0, %s102
      %s105 = sphi 0, %s104
      %s119 = sphi 0, %s105
      %s123 = sphi 0, %s123
      %s125 = sphi 0, %s123
      %s126 = sphi 0, %s125
      %s140 = sphi 0, %s126
      %s144 = sphi 0, %s144
      %s146 = sphi 0, %s144
      %s147 = sphi 0, %s146
      %s161 = sphi 0, %s147
      %s165 = sphi 0, %s165
      %s167 = sphi 0, %s165
      %s168 = sphi 0, %s167
      %s182 = sphi 0, %s168
      %s186 = sphi 0, %s186
      %s188 = sphi 0, %s186
      %s189 = sphi 0, %s188
      %s203 = sphi 0, %s189
      %s207 = sphi 0, %s207
      %s209 = sphi 0, %s207
      %s210 = sphi 0, %s209
      %s224 = sphi 0, %s210
    $region4: #{tpu_custom_call.1} parent=1 // loop_header_branch
      %19 = sbr.rel (%p17) target = $region8
    $region5: #{tpu_custom_call.1} parent=1 // loop_body
      %s21 = ssub.s32 %s16, 1
      %s22 = ssub.s32 %s16, 2
      %s23 = sadd.s32 %s16, 1
      %s24 = ssub.s32 %s16, %s23
      %p25 = scmp.eq.s32.totalorder %s24, 0
      %s27 = sadd.s32 %s26, 1
      %s28 = scalar_select %p25, %s26, %s27
      %p31 = pneg %p25
      %p32 = scmp.eq.s32.totalorder %s16, 2
      %p33 = por %p31, %p32
      %p34 = scmp.ne.s32.totalorder %s26, %s29
      %p35 = scmp.eq.s32.totalorder %s16, 0
      %p36 = por %p34, %p35
      %p37 = scmp.ne.s32.totalorder %s26, %s29
      %p38 = scmp.eq.s32.totalorder %s21, 2
      %p39 = por %p37, %p38
      %p40 = scmp.ne.s32.totalorder %s29, %s30
      %p41 = scmp.eq.s32.totalorder %s21, 0
      %p42 = por %p40, %p41
      %p43 = scmp.ne.s32.totalorder %s29, %s30
      %p44 = scmp.eq.s32.totalorder %s22, 2
      %p45 = por %p43, %p44
      %p47 = scmp.ne.s32.totalorder %s30, %s46
      %p48 = scmp.eq.s32.totalorder %s22, 0
      %p49 = por %p47, %p48
      %s50 = ssub.s32 %s16, %s23
      %p51 = scmp.eq.s32.totalorder %s50, 0
      %s53 = sadd.s32 %s52, 1
      %s54 = scalar_select %p51, %s52, %s53
      %p57 = pneg %p51
      %p58 = scmp.eq.s32.totalorder %s16, 2
      %p59 = por %p57, %p58
      %p60 = scmp.ne.s32.totalorder %s52, %s55
      %p61 = scmp.eq.s32.totalorder %s16, 0
      %p62 = por %p60, %p61
      %p63 = scmp.ne.s32.totalorder %s52, %s55
      %p64 = scmp.eq.s32.totalorder %s21, 2
      %p65 = por %p63, %p64
      %p66 = scmp.ne.s32.totalorder %s55, %s56
      %p67 = scmp.eq.s32.totalorder %s21, 0
      %p68 = por %p66, %p67
      %p69 = scmp.ne.s32.totalorder %s55, %s56
      %p70 = scmp.eq.s32.totalorder %s22, 2
      %p71 = por %p69, %p70
      %p73 = scmp.ne.s32.totalorder %s56, %s72
      %p74 = scmp.eq.s32.totalorder %s22, 0
      %p75 = por %p73, %p74
      %s76 = ssub.s32 %s16, %s23
      %p77 = scmp.eq.s32.totalorder %s76, 0
      %s79 = sadd.s32 %s78, 1
      %s80 = scalar_select %p77, %s78, %s79
      %p83 = pneg %p77
      %p84 = scmp.eq.s32.totalorder %s16, 2
      %p85 = por %p83, %p84
      %p86 = scmp.ne.s32.totalorder %s78, %s81
      %p87 = scmp.eq.s32.totalorder %s16, 0
      %p88 = por %p86, %p87
      %p89 = scmp.ne.s32.totalorder %s78, %s81
      %p90 = scmp.eq.s32.totalorder %s21, 2
      %p91 = por %p89, %p90
      %p92 = scmp.ne.s32.totalorder %s81, %s82
      %p93 = scmp.eq.s32.totalorder %s21, 0
      %p94 = por %p92, %p93
      %p95 = scmp.ne.s32.totalorder %s81, %s82
      %p96 = scmp.eq.s32.totalorder %s22, 2
      %p97 = por %p95, %p96
      %p99 = scmp.ne.s32.totalorder %s82, %s98
      %p100 = scmp.eq.s32.totalorder %s22, 0
      %p101 = por %p99, %p100
      %s103 = sadd.s32 %s102, 1
      %p106 = scmp.eq.s32.totalorder %s16, 2
      %p107 = scmp.ne.s32.totalorder %s102, %s104
      %p108 = scmp.eq.s32.totalorder %s16, 0
      %p109 = por %p107, %p108
      %p110 = scmp.ne.s32.totalorder %s102, %s104
      %p111 = scmp.eq.s32.totalorder %s21, 2
      %p112 = por %p110, %p111
      %p113 = scmp.ne.s32.totalorder %s104, %s105
      %p114 = scmp.eq.s32.totalorder %s21, 0
      %p115 = por %p113, %p114
      %p116 = scmp.ne.s32.totalorder %s104, %s105
      %p117 = scmp.eq.s32.totalorder %s22, 2
      %p118 = por %p116, %p117
      %p120 = scmp.ne.s32.totalorder %s105, %s119
      %p121 = scmp.eq.s32.totalorder %s22, 0
      %p122 = por %p120, %p121
      %s124 = sadd.s32 %s123, 1
      %p127 = scmp.eq.s32.totalorder %s16, 2
      %p128 = scmp.ne.s32.totalorder %s123, %s125
      %p129 = scmp.eq.s32.totalorder %s16, 0
      %p130 = por %p128, %p129
      %p131 = scmp.ne.s32.totalorder %s123, %s125
      %p132 = scmp.eq.s32.totalorder %s21, 2
      %p133 = por %p131, %p132
      %p134 = scmp.ne.s32.totalorder %s125, %s126
      %p135 = scmp.eq.s32.totalorder %s21, 0
      %p136 = por %p134, %p135
      %p137 = scmp.ne.s32.totalorder %s125, %s126
      %p138 = scmp.eq.s32.totalorder %s22, 2
      %p139 = por %p137, %p138
      %p141 = scmp.ne.s32.totalorder %s126, %s140
      %p142 = scmp.eq.s32.totalorder %s22, 0
      %p143 = por %p141, %p142
      %s145 = sadd.s32 %s144, 1
      %p148 = scmp.eq.s32.totalorder %s16, 2
      %p149 = scmp.ne.s32.totalorder %s144, %s146
      %p150 = scmp.eq.s32.totalorder %s16, 0
      %p151 = por %p149, %p150
      %p152 = scmp.ne.s32.totalorder %s144, %s146
      %p153 = scmp.eq.s32.totalorder %s21, 2
      %p154 = por %p152, %p153
      %p155 = scmp.ne.s32.totalorder %s146, %s147
      %p156 = scmp.eq.s32.totalorder %s21, 0
      %p157 = por %p155, %p156
      %p158 = scmp.ne.s32.totalorder %s146, %s147
      %p159 = scmp.eq.s32.totalorder %s22, 2
      %p160 = por %p158, %p159
      %p162 = scmp.ne.s32.totalorder %s147, %s161
      %p163 = scmp.eq.s32.totalorder %s22, 0
      %p164 = por %p162, %p163
      %s166 = sadd.s32 %s165, 1
      %p169 = scmp.eq.s32.totalorder %s16, 2
      %p170 = scmp.ne.s32.totalorder %s165, %s167
      %p171 = scmp.eq.s32.totalorder %s16, 0
      %p172 = por %p170, %p171
      %p173 = scmp.ne.s32.totalorder %s165, %s167
      %p174 = scmp.eq.s32.totalorder %s21, 2
      %p175 = por %p173, %p174
      %p176 = scmp.ne.s32.totalorder %s167, %s168
      %p177 = scmp.eq.s32.totalorder %s21, 0
      %p178 = por %p176, %p177
      %p179 = scmp.ne.s32.totalorder %s167, %s168
      %p180 = scmp.eq.s32.totalorder %s22, 2
      %p181 = por %p179, %p180
      %p183 = scmp.ne.s32.totalorder %s168, %s182
      %p184 = scmp.eq.s32.totalorder %s22, 0
      %p185 = por %p183, %p184
      %s187 = sadd.s32 %s186, 1
      %p190 = scmp.eq.s32.totalorder %s16, 2
      %p191 = scmp.ne.s32.totalorder %s186, %s188
      %p192 = scmp.eq.s32.totalorder %s16, 0
      %p193 = por %p191, %p192
      %p194 = scmp.ne.s32.totalorder %s186, %s188
      %p195 = scmp.eq.s32.totalorder %s21, 2
      %p196 = por %p194, %p195
      %p197 = scmp.ne.s32.totalorder %s188, %s189
      %p198 = scmp.eq.s32.totalorder %s21, 0
      %p199 = por %p197, %p198
      %p200 = scmp.ne.s32.totalorder %s188, %s189
      %p201 = scmp.eq.s32.totalorder %s22, 2
      %p202 = por %p200, %p201
      %p204 = scmp.ne.s32.totalorder %s189, %s203
      %p205 = scmp.eq.s32.totalorder %s22, 0
      %p206 = por %p204, %p205
      %s208 = sadd.s32 %s207, 1
      %p211 = scmp.eq.s32.totalorder %s16, 2
      %p212 = scmp.ne.s32.totalorder %s207, %s209
      %p213 = scmp.eq.s32.totalorder %s16, 0
      %p214 = por %p212, %p213
      %p215 = scmp.ne.s32.totalorder %s207, %s209
      %p216 = scmp.eq.s32.totalorder %s21, 2
      %p217 = por %p215, %p216
      %p218 = scmp.ne.s32.totalorder %s209, %s210
      %p219 = scmp.eq.s32.totalorder %s21, 0
      %p220 = por %p218, %p219
      %p221 = scmp.ne.s32.totalorder %s209, %s210
      %p222 = scmp.eq.s32.totalorder %s22, 2
      %p223 = por %p221, %p222
      %p225 = scmp.ne.s32.totalorder %s210, %s224
      %p226 = scmp.eq.s32.totalorder %s22, 0
      %p227 = por %p225, %p226
      %p228 = scmp.le.s32.totalorder 1, %s16
      %p229 = scmp.lt.s32.totalorder %s16, 4
      %p230 = pnand %p228, %p229
      %p231 = pneg %p230
      // Predicated region
      $region9: #{tpu_custom_call.1} parent=5 // pred_check
        _
      $region10: #{tpu_custom_call.1} parent=5 // pred_check_branch
        %233 = sbr.rel (%p230) target = $region12
      $region11: #{tpu_custom_call.1} parent=5 // pred_region
        %s234 = ssub.s32 %s16, 1
        // Predicated region
        $region13: #{tpu_custom_call.1} parent=11 // pred_check
          %p235 = pneg %p115
        $region14: #{tpu_custom_call.1} parent=11 // pred_check_branch
          %237 = sbr.rel (%p235) target = $region16
        $region15: #{tpu_custom_call.1} parent=11 // pred_region
          %239 = vsyncadd [#allocation5], 0
          %s240 = sshll.u32 %s3, 4
          %s241 = int_to_ptr.hbm [resolvable:$true] %s240
          %s242 = sshll.u32 [#allocation4], 4
          %s243 = int_to_ptr.vmem [resolvable:$true] %s242
          %248 = dma.hbm_to_vmem [thread:$0]  %s241, 4096, %s243, [#allocation5], 128, 128, 8
        $region16: #{tpu_custom_call.1} parent=11 // pred_fallthru
          _
        // Predicated region
        $region17: #{tpu_custom_call.1} parent=11 // pred_check
          %p249 = pneg %p136
        $region18: #{tpu_custom_call.1} parent=11 // pred_check_branch
          %251 = sbr.rel (%p249) target = $region20
        $region19: #{tpu_custom_call.1} parent=11 // pred_region
          _
        $region20: #{tpu_custom_call.1} parent=11 // pred_fallthru
          _
        // Predicated region
        $region21: #{tpu_custom_call.1} parent=11 // pred_check
          %p252 = pneg %p157
        $region22: #{tpu_custom_call.1} parent=11 // pred_check_branch
          %254 = sbr.rel (%p252) target = $region24
        $region23: #{tpu_custom_call.1} parent=11 // pred_region
          _
        $region24: #{tpu_custom_call.1} parent=11 // pred_fallthru
          _
        // Predicated region
        $region25: #{tpu_custom_call.1} parent=11 // pred_check
          %p255 = pneg %p178
        $region26: #{tpu_custom_call.1} parent=11 // pred_check_branch
          %257 = sbr.rel (%p255) target = $region28
        $region27: #{tpu_custom_call.1} parent=11 // pred_region
          _
        $region28: #{tpu_custom_call.1} parent=11 // pred_fallthru
          _
        // Predicated region
        $region29: #{tpu_custom_call.1} parent=11 // pred_check
          %p258 = pneg %p199
        $region30: #{tpu_custom_call.1} parent=11 // pred_check_branch
          %260 = sbr.rel (%p258) target = $region32
        $region31: #{tpu_custom_call.1} parent=11 // pred_region
          _
        $region32: #{tpu_custom_call.1} parent=11 // pred_fallthru
          _
      $region12: #{tpu_custom_call.1} parent=5 // pred_fallthru
        _
      %p261 = scmp.lt.s32.totalorder %s16, 3
      // Predicated region
      $region33: #{tpu_custom_call.1} parent=5 // pred_check
        %p262 = pneg %p261
      $region34: #{tpu_custom_call.1} parent=5 // pred_check_branch
        %264 = sbr.rel (%p262) target = $region36
      $region35: #{tpu_custom_call.1} parent=5 // pred_region
        // Predicated region
        $region37: #{tpu_custom_call.1} parent=35 // pred_check
          %p265 = pneg %p36
        $region38: #{tpu_custom_call.1} parent=35 // pred_check_branch
          %267 = sbr.rel (%p265) target = $region40
        $region39: #{tpu_custom_call.1} parent=35 // pred_region
          %s268 = smul.u32 4, %s16
          %p269 = scmp.lt.s32.totalorder %s268, 11
          %s270 = scalar_select %p269, %s268, 11
          %s271 = smul.addr %s270, 8
          %s272 = scalar_lea.vmem %s0, %s271
          %s273 = smul.u32 4, %s16
        $region40: #{tpu_custom_call.1} parent=35 // pred_fallthru
          _
        // Predicated region
        $region41: #{tpu_custom_call.1} parent=35 // pred_check
          %p274 = pneg %p62
        $region42: #{tpu_custom_call.1} parent=35 // pred_check_branch
          %276 = sbr.rel (%p274) target = $region44
        $region43: #{tpu_custom_call.1} parent=35 // pred_region
          %s277 = smul.u32 4, %s16
          %p278 = scmp.lt.s32.totalorder %s277, 11
          %s279 = scalar_select %p278, %s277, 11
          %s280 = smul.addr %s279, 8
          %s281 = scalar_lea.vmem %s1, %s280
          %s282 = smul.u32 4, %s16
        $region44: #{tpu_custom_call.1} parent=35 // pred_fallthru
          _
        // Predicated region
        $region45: #{tpu_custom_call.1} parent=35 // pred_check
          %p283 = pneg %p88
        $region46: #{tpu_custom_call.1} parent=35 // pred_check_branch
          %285 = sbr.rel (%p283) target = $region48
        $region47: #{tpu_custom_call.1} parent=35 // pred_region
          %s286 = smul.u32 4, %s16
          %p287 = scmp.lt.s32.totalorder %s286, 11
          %s288 = scalar_select %p287, %s286, 11
          %s289 = smul.addr %s288, 8
          %s290 = scalar_lea.vmem %s2, %s289
          %s291 = smul.u32 4, %s16
        $region48: #{tpu_custom_call.1} parent=35 // pred_fallthru
          _
      $region36: #{tpu_custom_call.1} parent=5 // pred_fallthru
        _
      %p292 = scmp.le.s32.totalorder 1, %s16
      %p293 = scmp.lt.s32.totalorder %s16, 4
      %p294 = pnand %p292, %p293
      %p295 = pneg %p294
      // Predicated region
      $region49: #{tpu_custom_call.1} parent=5 // pred_check
        _
      $region50: #{tpu_custom_call.1} parent=5 // pred_check_branch
        %297 = sbr.rel (%p294) target = $region52
      $region51: #{tpu_custom_call.1} parent=5 // pred_region
        %s298 = ssub.s32 %s16, 1
        // Predicated region
        $region53: #{tpu_custom_call.1} parent=51 // pred_check
          %p299 = pneg %p115
        $region54: #{tpu_custom_call.1} parent=51 // pred_check_branch
          %301 = sbr.rel (%p299) target = $region56
        $region55: #{tpu_custom_call.1} parent=51 // pred_region
          %303 = dma.done [#allocation5], 4096
        $region56: #{tpu_custom_call.1} parent=51 // pred_fallthru
          _
        %s304 = smul.u32 4, %s21
        %p305 = scmp.lt.s32.totalorder %s304, 11
        %s306 = scalar_select %p305, %s304, 11
        %s307 = smul.addr %s306, 8
        %s308 = scalar_lea.vmem %s0, %s307
        %p309 = pneg %p42
        %p310 = pneg %p39
        %s311 = smul.u32 4, %s21
        %p312 = scmp.lt.s32.totalorder %s311, 11
        %s313 = scalar_select %p312, %s311, 11
        %s314 = smul.addr %s313, 8
        %s315 = scalar_lea.vmem %s1, %s314
        %p316 = pneg %p68
        %p317 = pneg %p65
        %s318 = smul.u32 4, %s21
        %p319 = scmp.lt.s32.totalorder %s318, 11
        %s320 = scalar_select %p319, %s318, 11
        %s321 = smul.addr %s320, 8
        %s322 = scalar_lea.vmem %s2, %s321
        %p323 = pneg %p94
        %p324 = pneg %p91
        %p325 = pneg %p115
        %p326 = pneg %p112
        %p327 = pneg %p136
        %p328 = pneg %p133
        %p329 = pneg %p157
        %p330 = pneg %p154
        %p331 = pneg %p178
        %p332 = pneg %p175
        %p333 = pneg %p199
        %p334 = pneg %p196
        %p335 = pneg %p220
        %p336 = pneg %p217
        %s337 = smul.u32 4, %s21
        %p338 = scmp.lt.s32.totalorder %s337, 11
        %s339 = scalar_select %p338, %s337, 11
        %s340 = smul.addr %s339, 8
        %s341 = scalar_lea.vmem %s0, %s340
        %s342 = smul.u32 4, %s21
        %s343 = smul.u32 4, %s21
        %p344 = scmp.lt.s32.totalorder %s343, 11
        %s345 = scalar_select %p344, %s343, 11
        %s346 = smul.addr %s345, 8
        %s347 = scalar_lea.vmem %s1, %s346
        %s348 = smul.u32 4, %s21
        %s349 = smul.u32 4, %s21
        %p350 = scmp.lt.s32.totalorder %s349, 11
        %s351 = scalar_select %p350, %s349, 11
        %s352 = smul.addr %s351, 8
        %s353 = scalar_lea.vmem %s2, %s352
        %s354 = smul.u32 4, %s21
        %p355 = scmp.eq.s32.totalorder %s21, 0
        // Predicated region
        $region57: #{tpu_custom_call.1} parent=51 // pred_check
          %p356 = pneg %p355
        $region58: #{tpu_custom_call.1} parent=51 // pred_check_branch
          %358 = sbr.rel (%p356) target = $region60
        $region59: #{tpu_custom_call.1} parent=51 // pred_region
          %vm359 = vcmask 60416
          %360 = vst.msk [vmem:[#allocation2] sm:$0xf] %vm359, -1e+30
          %361 = vst.msk [vmem:[#allocation3] sm:$0xf] %vm359, 0.0
          %362 = vst [vmem:[#allocation7] sm:$0xff] 0.0
        $region60: #{tpu_custom_call.1} parent=51 // pred_fallthru
          _
        %v363 = vld [vmem:[%s347] sm:$0xff]
        %v364 = vld [vmem:[%s347 + $0x8] sm:$0xff]
        %v365 = vld [vmem:[%s347 + $0x10] sm:$0xff]
        %v366 = vld [vmem:[%s347 + $0x18] sm:$0xff]
        %v367 = vld [vmem:[%s341] sm:$0xff]
        %v368 = vld [vmem:[%s341 + $0x8] sm:$0xff]
        %v369 = vld [vmem:[%s341 + $0x10] sm:$0xff]
        %v370 = vld [vmem:[%s341 + $0x18] sm:$0xff]
        %v371 = vld [vmem:[#allocation4] sm:$0xff]
        %v372 = vld [vmem:[#allocation4 + $0x8] sm:$0xff]
        %v373 = vld [vmem:[#allocation4 + $0x10] sm:$0xff]
        %v374 = vld [vmem:[#allocation4 + $0x18] sm:$0xff]
        %v375 = vld [vmem:[#allocation4 + $0x20] sm:$0xff]
        %v376 = vld [vmem:[#allocation4 + $0x28] sm:$0xff]
        %v377 = vld [vmem:[#allocation4 + $0x30] sm:$0xff]
        %v378 = vld [vmem:[#allocation4 + $0x38] sm:$0xff]
        %v379 = vld [vmem:[#allocation4 + $0x40] sm:$0xff]
        %v380 = vld [vmem:[#allocation4 + $0x48] sm:$0xff]
        %v381 = vld [vmem:[#allocation4 + $0x50] sm:$0xff]
        %v382 = vld [vmem:[#allocation4 + $0x58] sm:$0xff]
        %v383 = vld [vmem:[#allocation4 + $0x60] sm:$0xff]
        %v384 = vld [vmem:[#allocation4 + $0x68] sm:$0xff]
        %v385 = vld [vmem:[#allocation4 + $0x70] sm:$0xff]
        %v386 = vld [vmem:[#allocation4 + $0x78] sm:$0xff]
        %v387 = vld [vmem:[#allocation4 + $0x80] sm:$0xff]
        %v388 = vld [vmem:[#allocation4 + $0x88] sm:$0xff]
        %v389 = vld [vmem:[#allocation4 + $0x90] sm:$0xff]
        %v390 = vld [vmem:[#allocation4 + $0x98] sm:$0xff]
        %v391 = vld [vmem:[#allocation4 + $0xa0] sm:$0xff]
        %v392 = vld [vmem:[#allocation4 + $0xa8] sm:$0xff]
        %v393 = vld [vmem:[#allocation4 + $0xb0] sm:$0xff]
        %v394 = vld [vmem:[#allocation4 + $0xb8] sm:$0xff]
        %v395 = vld [vmem:[#allocation4 + $0xc0] sm:$0xff]
        %v396 = vld [vmem:[#allocation4 + $0xc8] sm:$0xff]
        %v397 = vld [vmem:[#allocation4 + $0xd0] sm:$0xff]
        %v398 = vld [vmem:[#allocation4 + $0xd8] sm:$0xff]
        %v399 = vld [vmem:[#allocation4 + $0xe0] sm:$0xff]
        %v400 = vld [vmem:[#allocation4 + $0xe8] sm:$0xff]
        %v401 = vld [vmem:[#allocation4 + $0xf0] sm:$0xff]
        %v402 = vld [vmem:[#allocation4 + $0xf8] sm:$0xff]
        %403 = vmatpush.msra.mxu0 %v402
        %404 = vmatpush.msra.mxu0 %v401
        %405 = vmatpush.msra.mxu0 %v400
        %406 = vmatpush.msra.mxu0 %v399
        %407 = vmatpush.msra.mxu0 %v398
        %408 = vmatpush.msra.mxu0 %v397
        %409 = vmatpush.msra.mxu0 %v396
        %410 = vmatpush.msra.mxu0 %v395
        %411 = vmatpush.msra.mxu0 %v394
        %412 = vmatpush.msra.mxu0 %v393
        %413 = vmatpush.msra.mxu0 %v392
        %414 = vmatpush.msra.mxu0 %v391
        %415 = vmatpush.msra.mxu0 %v390
        %416 = vmatpush.msra.mxu0 %v389
        %417 = vmatpush.msra.mxu0 %v388
        %418 = vmatpush.msra.mxu0 %v387
        %419 = vmatmul.f32.gmra.mxu0 %v363
        %v420 = vpop.f32.mrf.mxu0
        %v421 = vadd.f32 0.0, %v420
        %422 = vmatmul.f32.gmra.mxu0 %v364
        %v423 = vpop.f32.mrf.mxu0
        %v424 = vadd.f32 0.0, %v423
        %425 = vmatmul.f32.gmra.mxu0 %v365
        %v426 = vpop.f32.mrf.mxu0
        %v427 = vadd.f32 0.0, %v426
        %428 = vmatmul.f32.gmra.mxu0 %v366
        %v429 = vpop.f32.mrf.mxu0
        %v430 = vadd.f32 0.0, %v429
        %431 = vdwg.mxu0
        %432 = vmatpush.msra.mxu0 %v386
        %433 = vmatpush.msra.mxu0 %v385
        %434 = vmatpush.msra.mxu0 %v384
        %435 = vmatpush.msra.mxu0 %v383
        %436 = vmatpush.msra.mxu0 %v382
        %437 = vmatpush.msra.mxu0 %v381
        %438 = vmatpush.msra.mxu0 %v380
        %439 = vmatpush.msra.mxu0 %v379
        %440 = vmatpush.msra.mxu0 %v378
        %441 = vmatpush.msra.mxu0 %v377
        %442 = vmatpush.msra.mxu0 %v376
        %443 = vmatpush.msra.mxu0 %v375
        %444 = vmatpush.msra.mxu0 %v374
        %445 = vmatpush.msra.mxu0 %v373
        %446 = vmatpush.msra.mxu0 %v372
        %447 = vmatpush.msra.mxu0 %v371
        %448 = vmatmul.f32.gmra.mxu0 %v367
        %v449 = vpop.f32.mrf.mxu0
        %v450 = vadd.f32 %v421, %v449
        %451 = vmatmul.f32.gmra.mxu0 %v368
        %v452 = vpop.f32.mrf.mxu0
        %v453 = vadd.f32 %v424, %v452
        %454 = vmatmul.f32.gmra.mxu0 %v369
        %v455 = vpop.f32.mrf.mxu0
        %v456 = vadd.f32 %v427, %v455
        %457 = vmatmul.f32.gmra.mxu0 %v370
        %v458 = vpop.f32.mrf.mxu0
        %v459 = vadd.f32 %v430, %v458
        %460 = vdwg.mxu0
        %v461 = vld [vmem:[%s4] sm:$0x1]
        %v463 = vperm.slane %v461, 0
        %v465 = vadd.f32 %v450, %v463
        %v466 = vadd.f32 %v453, %v463
        %v467 = vadd.f32 %v456, %v463
        %v468 = vadd.f32 %v459, %v463
        %vm469 = vcmp.ge.f32.partialorder %v465, 0.0
        %vm470 = vcmp.ge.f32.partialorder %v466, 0.0
        %vm471 = vcmp.ge.f32.partialorder %v467, 0.0
        %vm472 = vcmp.ge.f32.partialorder %v468, 0.0
        %v473 = vmul.f32 %v465, 0.01
        %v474 = vmul.f32 %v466, 0.01
        %v475 = vmul.f32 %v467, 0.01
        %v476 = vmul.f32 %v468, 0.01
        %v477 = vsel %vm469, %v465, %v473
        %v478 = vsel %vm470, %v466, %v474
        %v479 = vsel %vm471, %v467, %v475
        %v480 = vsel %vm472, %v468, %v476
        %v481 = vld [vmem:[%s5] sm:$0x1]
        %v483 = vperm.slane %v481, 0
        %v485 = vmul.f32 %v477, %v483
        %v486 = vmul.f32 %v478, %v483
        %v487 = vmul.f32 %v479, %v483
        %v488 = vmul.f32 %v480, %v483
        %v489 = vld [vmem:[%s6] sm:$0xff]
        %v490 = vld [vmem:[%s6 + $0x8] sm:$0xff]
        %v491 = vld [vmem:[%s6 + $0x10] sm:$0xff]
        %v492 = vld [vmem:[%s6 + $0x18] sm:$0xff]
        %v493 = vld [vmem:[%s6 + $0x20] sm:$0xff]
        %v494 = vld [vmem:[%s6 + $0x28] sm:$0xff]
        %v495 = vld [vmem:[%s6 + $0x30] sm:$0xff]
        %v496 = vld [vmem:[%s6 + $0x38] sm:$0xff]
        %v497 = vld [vmem:[%s6 + $0x40] sm:$0xff]
        %v498 = vld [vmem:[%s6 + $0x48] sm:$0xff]
        %v499 = vld [vmem:[%s6 + $0x50] sm:$0xff]
        %v500 = vld [vmem:[%s6 + $0x58] sm:$0xff]
        %v501 = vld [vmem:[%s6 + $0x60] sm:$0xff]
        %v502 = vld [vmem:[%s6 + $0x68] sm:$0xff]
        %v503 = vld [vmem:[%s6 + $0x70] sm:$0xff]
        %v504 = vld [vmem:[%s6 + $0x78] sm:$0xff]
        %505 = vmatpush.msra.mxu0 %v504
        %506 = vmatpush.msra.mxu0 %v503
        %507 = vmatpush.msra.mxu0 %v502
        %508 = vmatpush.msra.mxu0 %v501
        %509 = vmatpush.msra.mxu0 %v500
        %510 = vmatpush.msra.mxu0 %v499
        %511 = vmatpush.msra.mxu0 %v498
        %512 = vmatpush.msra.mxu0 %v497
        %513 = vmatpush.msra.mxu0 %v496
        %514 = vmatpush.msra.mxu0 %v495
        %515 = vmatpush.msra.mxu0 %v494
        %516 = vmatpush.msra.mxu0 %v493
        %517 = vmatpush.msra.mxu0 %v492
        %518 = vmatpush.msra.mxu0 %v491
        %519 = vmatpush.msra.mxu0 %v490
        %520 = vmatpush.msra.mxu0 %v489
        %521 = vmatmul.f32.gmra.mxu0 %v485
        %v522 = vpop.f32.mrf.mxu0
        %v523 = vadd.f32 0.0, %v522
        %524 = vmatmul.f32.gmra.mxu0 %v486
        %v525 = vpop.f32.mrf.mxu0
        %v526 = vadd.f32 0.0, %v525
        %527 = vmatmul.f32.gmra.mxu0 %v487
        %v528 = vpop.f32.mrf.mxu0
        %v529 = vadd.f32 0.0, %v528
        %530 = vmatmul.f32.gmra.mxu0 %v488
        %v531 = vpop.f32.mrf.mxu0
        %v532 = vadd.f32 0.0, %v531
        %533 = vdwg.mxu0
        %v534 = vld [vmem:[%s353] sm:$0xff]
        %v535 = vld [vmem:[%s353 + $0x8] sm:$0xff]
        %v536 = vld [vmem:[%s353 + $0x10] sm:$0xff]
        %v537 = vld [vmem:[%s353 + $0x18] sm:$0xff]
        %v538 = vlaneseq
        %v539 = vand.u32 %v538, 127
        %540 = vset.pattern.permute.xlu0 0
        %541 = vperm.xlu0 %540, %v534
        %v542 = vpop.permute.xlu0 %541
        %543 = vset.pattern.permute.xlu0 0
        %544 = vperm.xlu0 %543, %v535
        %v545 = vpop.permute.xlu0 %544
        %546 = vset.pattern.permute.xlu0 0
        %547 = vperm.xlu0 %546, %v536
        %v548 = vpop.permute.xlu0 %547
        %549 = vset.pattern.permute.xlu0 0
        %550 = vperm.xlu0 %549, %v537
        %v551 = vpop.permute.xlu0 %550
        %vm552 = vcmp.eq.s32.totalorder %v542, %v539
        %vm553 = vcmp.eq.s32.totalorder %v545, %v539
        %vm554 = vcmp.eq.s32.totalorder %v548, %v539
        %vm555 = vcmp.eq.s32.totalorder %v551, %v539
        %v556 = vsel %vm552, 1, 0
        %v557 = vsel %vm553, 1, 0
        %v558 = vsel %vm554, 1, 0
        %v559 = vsel %vm555, 1, 0
        %v560 = vcvt.s32.f32 %v556
        %v561 = vcvt.s32.f32 %v557
        %v562 = vcvt.s32.f32 %v558
        %v563 = vcvt.s32.f32 %v559
        %v564 = vsel %vm552, 0.0, -1e+30
        %v565 = vsel %vm553, 0.0, -1e+30
        %v566 = vsel %vm554, 0.0, -1e+30
        %v567 = vsel %vm555, 0.0, -1e+30
        %v568 = vld [vmem:[#allocation2] sm:$0xf]
        %570 = vset.pattern.permute.xlu0 0
        %571 = vperm.xlu0 %570, %v523
        %v572 = vpop.permute.xlu0 %571
        %575 = vset.pattern.permute.xlu0 0
        %576 = vperm.xlu0 %575, %v526
        %v577 = vpop.permute.xlu0 %576
        %580 = vset.pattern.permute.xlu0 0
        %581 = vperm.xlu0 %580, %v529
        %v582 = vpop.permute.xlu0 %581
        %585 = vset.pattern.permute.xlu0 0
        %586 = vperm.xlu0 %585, %v532
        %v587 = vpop.permute.xlu0 %586
        %v589 = vadd.f32 %v572, %v564
        %v590 = vadd.f32 %v577, %v565
        %v591 = vadd.f32 %v582, %v566
        %v592 = vadd.f32 %v587, %v567
        %vm593 = vcmask 64512
        %v594 = vsel %vm593, %v589, -inf
        %v595 = vsel %vm593, %v590, -inf
        %v596 = vsel %vm593, %v591, -inf
        %v597 = vsel %vm593, %v592, -inf
        %v598 = vmax.f32 %v594, %v595
        %v599 = vmax.f32 %v596, %v597
        %v600 = vmax.f32 %v598, %v599
        %v601 = vrot.slane %v600, 4
        %v602 = vmax.f32 %v600, %v601
        %v603 = vrot.slane %v602, 2
        %v604 = vmax.f32 %v602, %v603
        %v605 = vrot.slane %v604, 1
        %v606 = vmax.f32 %v604, %v605
        %607 = vset.pattern.permute.xlu0 1
        %608 = vperm.xlu0 %607, %v523
        %v609 = vpop.permute.xlu0 %608
        %611 = vset.pattern.permute.xlu0 1
        %612 = vperm.xlu0 %611, %v526
        %v613 = vpop.permute.xlu0 %612
        %615 = vset.pattern.permute.xlu0 1
        %616 = vperm.xlu0 %615, %v529
        %v617 = vpop.permute.xlu0 %616
        %619 = vset.pattern.permute.xlu0 1
        %620 = vperm.xlu0 %619, %v532
        %v621 = vpop.permute.xlu0 %620
        %v623 = vadd.f32 %v609, %v564
        %v624 = vadd.f32 %v613, %v565
        %v625 = vadd.f32 %v617, %v566
        %v626 = vadd.f32 %v621, %v567
        %v627 = vsel %vm593, %v623, -inf
        %v628 = vsel %vm593, %v624, -inf
        %v629 = vsel %vm593, %v625, -inf
        %v630 = vsel %vm593, %v626, -inf
        %v631 = vmax.f32 %v627, %v628
        %v632 = vmax.f32 %v629, %v630
        %v633 = vmax.f32 %v631, %v632
        %v634 = vrot.slane %v633, 4
        %v635 = vmax.f32 %v633, %v634
        %v636 = vrot.slane %v635, 2
        %v637 = vmax.f32 %v635, %v636
        %v638 = vrot.slane %v637, 1
        %v639 = vmax.f32 %v637, %v638
        %640 = vset.pattern.permute.xlu0 2
        %641 = vperm.xlu0 %640, %v523
        %v642 = vpop.permute.xlu0 %641
        %644 = vset.pattern.permute.xlu0 2
        %645 = vperm.xlu0 %644, %v526
        %v646 = vpop.permute.xlu0 %645
        %648 = vset.pattern.permute.xlu0 2
        %649 = vperm.xlu0 %648, %v529
        %v650 = vpop.permute.xlu0 %649
        %652 = vset.pattern.permute.xlu0 2
        %653 = vperm.xlu0 %652, %v532
        %v654 = vpop.permute.xlu0 %653
        %v656 = vadd.f32 %v642, %v564
        %v657 = vadd.f32 %v646, %v565
        %v658 = vadd.f32 %v650, %v566
        %v659 = vadd.f32 %v654, %v567
        %v660 = vsel %vm593, %v656, -inf
        %v661 = vsel %vm593, %v657, -inf
        %v662 = vsel %vm593, %v658, -inf
        %v663 = vsel %vm593, %v659, -inf
        %v664 = vmax.f32 %v660, %v661
        %v665 = vmax.f32 %v662, %v663
        %v666 = vmax.f32 %v664, %v665
        %v667 = vrot.slane %v666, 4
        %v668 = vmax.f32 %v666, %v667
        %v669 = vrot.slane %v668, 2
        %v670 = vmax.f32 %v668, %v669
        %v671 = vrot.slane %v670, 1
        %v672 = vmax.f32 %v670, %v671
        %673 = vset.pattern.permute.xlu0 3
        %674 = vperm.xlu0 %673, %v523
        %v675 = vpop.permute.xlu0 %674
        %677 = vset.pattern.permute.xlu0 3
        %678 = vperm.xlu0 %677, %v526
        %v679 = vpop.permute.xlu0 %678
        %681 = vset.pattern.permute.xlu0 3
        %682 = vperm.xlu0 %681, %v529
        %v683 = vpop.permute.xlu0 %682
        %685 = vset.pattern.permute.xlu0 3
        %686 = vperm.xlu0 %685, %v532
        %v687 = vpop.permute.xlu0 %686
        %v689 = vadd.f32 %v675, %v564
        %v690 = vadd.f32 %v679, %v565
        %v691 = vadd.f32 %v683, %v566
        %v692 = vadd.f32 %v687, %v567
        %v693 = vsel %vm593, %v689, -inf
        %v694 = vsel %vm593, %v690, -inf
        %v695 = vsel %vm593, %v691, -inf
        %v696 = vsel %vm593, %v692, -inf
        %v697 = vmax.f32 %v693, %v694
        %v698 = vmax.f32 %v695, %v696
        %v699 = vmax.f32 %v697, %v698
        %v700 = vrot.slane %v699, 4
        %v701 = vmax.f32 %v699, %v700
        %v702 = vrot.slane %v701, 2
        %v703 = vmax.f32 %v701, %v702
        %v704 = vrot.slane %v703, 1
        %v705 = vmax.f32 %v703, %v704
        %vm706 = vcmask 1040384
        %v707 = vsel %vm706, %v606, %v639
        %vm708 = vcmask 1041408
        %v709 = vsel %vm708, %v707, %v672
        %vm710 = vcmask 1042432
        %v711 = vsel %vm710, %v709, %v705
        %v712 = vmax.f32 %v568, %v711
        %v713 = vsub.f32 %v568, %v712
        %v714 = vmul.f32 %v713, 1.442695
        %v715 = vpow.pop %v714
        %v717 = vsel %vm593, %v560, 0
        %v720 = vsel %vm593, %v561, 0
        %v723 = vsel %vm593, %v562, 0
        %v726 = vsel %vm593, %v563, 0
        %v729 = vsel %vm593, %v712, 0
        %731 = vmatpush.xpose.msra.mxu0 0.0
        %732 = vmatpush.xpose.msra.mxu0 0.0
        %733 = vmatpush.xpose.msra.mxu0 0.0
        %734 = vmatpush.xpose.msra.mxu0 0.0
        %735 = vmatpush.xpose.msra.mxu0 0.0
        %736 = vmatpush.xpose.msra.mxu0 0.0
        %737 = vmatpush.xpose.msra.mxu0 0.0
        %738 = vmatpush.xpose.msra.mxu0 0.0
        %739 = vmatpush.xpose.msra.mxu0 0.0
        %740 = vmatpush.xpose.msra.mxu0 0.0
        %741 = vmatpush.xpose.msra.mxu0 0.0
        %742 = vmatpush.xpose.msra.mxu0 0.0
        %743 = vmatpush.xpose.msra.mxu0 0.0
        %744 = vmatpush.xpose.msra.mxu0 0.0
        %745 = vmatpush.xpose.msra.mxu0 0.0
        %746 = vmatpush.xpose.msra.mxu0 %v729
        %747 = vmatmul.f32.gmra.mxu0 %v717
        %v748 = vpop.f32.mrf.mxu0
        %v749 = vadd.f32 0.0, %v748
        %750 = vmatmul.f32.gmra.mxu0 %v720
        %v751 = vpop.f32.mrf.mxu0
        %v752 = vadd.f32 0.0, %v751
        %753 = vmatmul.f32.gmra.mxu0 %v723
        %v754 = vpop.f32.mrf.mxu0
        %v755 = vadd.f32 0.0, %v754
        %756 = vmatmul.f32.gmra.mxu0 %v726
        %v757 = vpop.f32.mrf.mxu0
        %v758 = vadd.f32 0.0, %v757
        %759 = vdwg.mxu0
        %v760 = vsub.f32 %v523, %v749
        %v761 = vsub.f32 %v526, %v752
        %v762 = vsub.f32 %v529, %v755
        %v763 = vsub.f32 %v532, %v758
        %v764 = vmul.f32 %v760, 1.442695
        %v765 = vpow.pop %v764
        %v766 = vmul.f32 %v761, 1.442695
        %v767 = vpow.pop %v766
        %v768 = vmul.f32 %v762, 1.442695
        %v769 = vpow.pop %v768
        %v770 = vmul.f32 %v763, 1.442695
        %v771 = vpow.pop %v770
        %772 = vxpose.xlu0.b32.start [1/16] %v765, 128
        %773 = vxpose.xlu0.b32.cont [2/16] %v767, 128
        %774 = vxpose.xlu0.b32.cont [3/16] %v769, 128
        %775 = vxpose.xlu0.b32.cont [4/16] %v771, 128
        %776 = vxpose.xlu0.b32.cont [5/16] 0.0, 128
        %777 = vxpose.xlu0.b32.cont [6/16] 0.0, 128
        %778 = vxpose.xlu0.b32.cont [7/16] 0.0, 128
        %779 = vxpose.xlu0.b32.cont [8/16] 0.0, 128
        %780 = vxpose.xlu0.b32.cont [9/16] 0.0, 128
        %781 = vxpose.xlu0.b32.cont [10/16] 0.0, 128
        %782 = vxpose.xlu0.b32.cont [11/16] 0.0, 128
        %783 = vxpose.xlu0.b32.cont [12/16] 0.0, 128
        %784 = vxpose.xlu0.b32.cont [13/16] 0.0, 128
        %785 = vxpose.xlu0.b32.cont [14/16] 0.0, 128
        %786 = vxpose.xlu0.b32.cont [15/16] 0.0, 128
        %787 = vxpose.xlu0.b32.end [16/16] 0.0, 128
        %v788 = vpop.trf.xlu0
        %v789 = vpop.trf.xlu0
        %v790 = vpop.trf.xlu0
        %v791 = vpop.trf.xlu0
        %v792 = vpop.trf.xlu0
        %v793 = vpop.trf.xlu0
        %v794 = vpop.trf.xlu0
        %v795 = vpop.trf.xlu0
        %v796 = vpop.trf.xlu0
        %v797 = vpop.trf.xlu0
        %v798 = vpop.trf.xlu0
        %v799 = vpop.trf.xlu0
        %v800 = vpop.trf.xlu0
        %v801 = vpop.trf.xlu0
        %v802 = vpop.trf.xlu0
        %v803 = vpop.trf.xlu0
        %vm804 = vcmask 261120
        %v806 = vsel %vm804, %v788, 0
        %808 = vmatpush.msra.mxu0 0.0
        %809 = vmatpush.msra.mxu0 0.0
        %810 = vmatpush.msra.mxu0 0.0
        %811 = vmatpush.msra.mxu0 0.0
        %812 = vmatpush.msra.mxu0 0.0
        %813 = vmatpush.msra.mxu0 0.0
        %814 = vmatpush.msra.mxu0 0.0
        %815 = vmatpush.msra.mxu0 0.0
        %816 = vmatpush.msra.mxu0 0.0
        %817 = vmatpush.msra.mxu0 0.0
        %818 = vmatpush.msra.mxu0 0.0
        %819 = vmatpush.msra.mxu0 0.0
        %820 = vmatpush.msra.mxu0 %v563
        %821 = vmatpush.msra.mxu0 %v562
        %822 = vmatpush.msra.mxu0 %v561
        %823 = vmatpush.msra.mxu0 %v560
        %824 = vmatmul.f32.gmra.mxu0 %v806
        %v825 = vpop.f32.mrf.mxu0
        %v826 = vadd.f32 0.0, %v825
        %827 = vdwg.mxu0
        %v828 = vld [vmem:[#allocation3] sm:$0xf]
        %v829 = vmul.f32 %v828, %v715
        %v830 = vadd.f32 %v829, %v826
        %vm831 = vcmask 60416
        %832 = vst.msk [vmem:[#allocation3] sm:$0xf] %vm831, %v830
        %833 = vst.msk [vmem:[#allocation2] sm:$0xf] %vm831, %v712
        %v834 = vld [vmem:[%s7] sm:$0xf]
        %835 = vxpose.xlu0.b32.start [1/16] %v715, 128
        %836 = vxpose.xlu0.b32.cont [2/16] 0.0, 128
        %837 = vxpose.xlu0.b32.cont [3/16] 0.0, 128
        %838 = vxpose.xlu0.b32.cont [4/16] 0.0, 128
        %839 = vxpose.xlu0.b32.cont [5/16] 0.0, 128
        %840 = vxpose.xlu0.b32.cont [6/16] 0.0, 128
        %841 = vxpose.xlu0.b32.cont [7/16] 0.0, 128
        %842 = vxpose.xlu0.b32.cont [8/16] 0.0, 128
        %843 = vxpose.xlu0.b32.cont [9/16] 0.0, 128
        %844 = vxpose.xlu0.b32.cont [10/16] 0.0, 128
        %845 = vxpose.xlu0.b32.cont [11/16] 0.0, 128
        %846 = vxpose.xlu0.b32.cont [12/16] 0.0, 128
        %847 = vxpose.xlu0.b32.cont [13/16] 0.0, 128
        %848 = vxpose.xlu0.b32.cont [14/16] 0.0, 128
        %849 = vxpose.xlu0.b32.cont [15/16] 0.0, 128
        %850 = vxpose.xlu0.b32.end [16/16] 0.0, 128
        %v851 = vpop.trf.xlu0
        %v852 = vpop.trf.xlu0
        %v853 = vpop.trf.xlu0
        %v854 = vpop.trf.xlu0
        %v855 = vpop.trf.xlu0
        %v856 = vpop.trf.xlu0
        %v857 = vpop.trf.xlu0
        %v858 = vpop.trf.xlu0
        %v859 = vpop.trf.xlu0
        %v860 = vpop.trf.xlu0
        %v861 = vpop.trf.xlu0
        %v862 = vpop.trf.xlu0
        %v863 = vpop.trf.xlu0
        %v864 = vpop.trf.xlu0
        %v865 = vpop.trf.xlu0
        %v866 = vpop.trf.xlu0
        %vm867 = vcmask 31744
        %v869 = vsel %vm867, %v851, 0
        %vm871 = vcmask 1043456
        %v873 = vsel %vm871, %v834, 0
        %875 = vmatpush.msra.mxu0 0.0
        %876 = vmatpush.msra.mxu0 0.0
        %877 = vmatpush.msra.mxu0 0.0
        %878 = vmatpush.msra.mxu0 0.0
        %879 = vmatpush.msra.mxu0 0.0
        %880 = vmatpush.msra.mxu0 0.0
        %881 = vmatpush.msra.mxu0 0.0
        %882 = vmatpush.msra.mxu0 0.0
        %883 = vmatpush.msra.mxu0 0.0
        %884 = vmatpush.msra.mxu0 0.0
        %885 = vmatpush.msra.mxu0 0.0
        %886 = vmatpush.msra.mxu0 0.0
        %887 = vmatpush.msra.mxu0 0.0
        %888 = vmatpush.msra.mxu0 0.0
        %889 = vmatpush.msra.mxu0 0.0
        %890 = vmatpush.msra.mxu0 %v873
        %891 = vmatmul.f32.gmra.mxu0 %v869
        %v892 = vpop.f32.mrf.mxu0
        %v893 = vadd.f32 0.0, %v892
        %894 = vdwg.mxu0
        %v896 = vsel %vm867, %v765, 0
        %v899 = vsel %vm867, %v767, 0
        %v902 = vsel %vm867, %v769, 0
        %v905 = vsel %vm867, %v771, 0
        %907 = vmatpush.msra.mxu0 0.0
        %908 = vmatpush.msra.mxu0 0.0
        %909 = vmatpush.msra.mxu0 0.0
        %910 = vmatpush.msra.mxu0 0.0
        %911 = vmatpush.msra.mxu0 0.0
        %912 = vmatpush.msra.mxu0 0.0
        %913 = vmatpush.msra.mxu0 0.0
        %914 = vmatpush.msra.mxu0 0.0
        %915 = vmatpush.msra.mxu0 0.0
        %916 = vmatpush.msra.mxu0 0.0
        %917 = vmatpush.msra.mxu0 0.0
        %918 = vmatpush.msra.mxu0 0.0
        %919 = vmatpush.msra.mxu0 0.0
        %920 = vmatpush.msra.mxu0 0.0
        %921 = vmatpush.msra.mxu0 0.0
        %922 = vmatpush.msra.mxu0 %v873
        %923 = vmatmul.f32.gmra.mxu0 %v896
        %v924 = vpop.f32.mrf.mxu0
        %v925 = vadd.f32 0.0, %v924
        %926 = vmatmul.f32.gmra.mxu0 %v899
        %v927 = vpop.f32.mrf.mxu0
        %v928 = vadd.f32 0.0, %v927
        %929 = vmatmul.f32.gmra.mxu0 %v902
        %v930 = vpop.f32.mrf.mxu0
        %v931 = vadd.f32 0.0, %v930
        %932 = vmatmul.f32.gmra.mxu0 %v905
        %v933 = vpop.f32.mrf.mxu0
        %v934 = vadd.f32 0.0, %v933
        %935 = vdwg.mxu0
        %v936 = vmul.f32 %v925, %v363
        %v937 = vmul.f32 %v928, %v364
        %v938 = vmul.f32 %v931, %v365
        %v939 = vmul.f32 %v934, %v366
        %940 = vxpose.xlu0.b32.start [1/16] %v560, 128
        %941 = vxpose.xlu0.b32.cont [2/16] %v561, 128
        %942 = vxpose.xlu0.b32.cont [3/16] %v562, 128
        %943 = vxpose.xlu0.b32.cont [4/16] %v563, 128
        %944 = vxpose.xlu0.b32.cont [5/16] 0.0, 128
        %945 = vxpose.xlu0.b32.cont [6/16] 0.0, 128
        %946 = vxpose.xlu0.b32.cont [7/16] 0.0, 128
        %947 = vxpose.xlu0.b32.cont [8/16] 0.0, 128
        %948 = vxpose.xlu0.b32.cont [9/16] 0.0, 128
        %949 = vxpose.xlu0.b32.cont [10/16] 0.0, 128
        %950 = vxpose.xlu0.b32.cont [11/16] 0.0, 128
        %951 = vxpose.xlu0.b32.cont [12/16] 0.0, 128
        %952 = vxpose.xlu0.b32.cont [13/16] 0.0, 128
        %953 = vxpose.xlu0.b32.cont [14/16] 0.0, 128
        %954 = vxpose.xlu0.b32.cont [15/16] 0.0, 128
        %955 = vxpose.xlu0.b32.end [16/16] 0.0, 128
        %v956 = vpop.trf.xlu0
        %v957 = vpop.trf.xlu0
        %v958 = vpop.trf.xlu0
        %v959 = vpop.trf.xlu0
        %v960 = vpop.trf.xlu0
        %v961 = vpop.trf.xlu0
        %v962 = vpop.trf.xlu0
        %v963 = vpop.trf.xlu0
        %v964 = vpop.trf.xlu0
        %v965 = vpop.trf.xlu0
        %v966 = vpop.trf.xlu0
        %v967 = vpop.trf.xlu0
        %v968 = vpop.trf.xlu0
        %v969 = vpop.trf.xlu0
        %v970 = vpop.trf.xlu0
        %v971 = vpop.trf.xlu0
        %v973 = vsel %vm804, %v956, 0
        %975 = vmatpush.msra.mxu0 0.0
        %976 = vmatpush.msra.mxu0 0.0
        %977 = vmatpush.msra.mxu0 0.0
        %978 = vmatpush.msra.mxu0 0.0
        %979 = vmatpush.msra.mxu0 0.0
        %980 = vmatpush.msra.mxu0 0.0
        %981 = vmatpush.msra.mxu0 0.0
        %982 = vmatpush.msra.mxu0 0.0
        %983 = vmatpush.msra.mxu0 0.0
        %984 = vmatpush.msra.mxu0 0.0
        %985 = vmatpush.msra.mxu0 0.0
        %986 = vmatpush.msra.mxu0 0.0
        %987 = vmatpush.msra.mxu0 %v939
        %988 = vmatpush.msra.mxu0 %v938
        %989 = vmatpush.msra.mxu0 %v937
        %990 = vmatpush.msra.mxu0 %v936
        %991 = vmatmul.f32.gmra.mxu0 %v973
        %v992 = vpop.f32.mrf.mxu0
        %v993 = vadd.f32 0.0, %v992
        %994 = vdwg.mxu0
        %v995 = vld [vmem:[#allocation7] sm:$0xff]
        %v996 = vmul.f32 %v995, %v893
        %v997 = vadd.f32 %v996, %v993
        %998 = vst [vmem:[#allocation7] sm:$0xff] %v997
        %p999 = scmp.eq.s32.totalorder %s21, 2
        // Predicated region
        $region61: #{tpu_custom_call.1} parent=51 // pred_check
          %p1000 = pneg %p999
        $region62: #{tpu_custom_call.1} parent=51 // pred_check_branch
          %1002 = sbr.rel (%p1000) target = $region64
        $region63: #{tpu_custom_call.1} parent=51 // pred_region
          %v1003 = vld [vmem:[#allocation3] sm:$0xf]
          %v1004 = vadd.f32 %v1003, 1e-16
          %v1005 = vrcp.pop %v1004
          %v1006 = vmul.f32 %v1004, %v1005
          %v1007 = vsub.f32 1.0, %v1006
          %v1008 = vmul.f32 %v1005, %v1007
          %v1009 = vadd.f32 %v1005, %v1008
          %vm1010 = vweird.f32 %v1004
          %vm1011 = vweird.f32 %v1005
          %vm1012 = vmor %vm1010, %vm1011
          %v1013 = vsel %vm1012, %v1005, %v1009
          %v1014 = vand.u32 2147483647, %v1004
          %vm1015 = vcmp.eq.f32.partialorder %v1014, 8.507059e+37
          %v1016 = vand.u32 %v1004, 2147483648
          %v1017 = vor.u32 1.1754944e-38, %v1016
          %v1018 = vsel %vm1015, %v1017, %v1013
          %v1019 = vmul.f32 1.0, %v1018
          %1020 = vxpose.xlu0.b32.start [1/16] %v1019, 128
          %1021 = vxpose.xlu0.b32.cont [2/16] 0.0, 128
          %1022 = vxpose.xlu0.b32.cont [3/16] 0.0, 128
          %1023 = vxpose.xlu0.b32.cont [4/16] 0.0, 128
          %1024 = vxpose.xlu0.b32.cont [5/16] 0.0, 128
          %1025 = vxpose.xlu0.b32.cont [6/16] 0.0, 128
          %1026 = vxpose.xlu0.b32.cont [7/16] 0.0, 128
          %1027 = vxpose.xlu0.b32.cont [8/16] 0.0, 128
          %1028 = vxpose.xlu0.b32.cont [9/16] 0.0, 128
          %1029 = vxpose.xlu0.b32.cont [10/16] 0.0, 128
          %1030 = vxpose.xlu0.b32.cont [11/16] 0.0, 128
          %1031 = vxpose.xlu0.b32.cont [12/16] 0.0, 128
          %1032 = vxpose.xlu0.b32.cont [13/16] 0.0, 128
          %1033 = vxpose.xlu0.b32.cont [14/16] 0.0, 128
          %1034 = vxpose.xlu0.b32.cont [15/16] 0.0, 128
          %1035 = vxpose.xlu0.b32.end [16/16] 0.0, 128
          %v1036 = vpop.trf.xlu0
          %v1037 = vpop.trf.xlu0
          %v1038 = vpop.trf.xlu0
          %v1039 = vpop.trf.xlu0
          %v1040 = vpop.trf.xlu0
          %v1041 = vpop.trf.xlu0
          %v1042 = vpop.trf.xlu0
          %v1043 = vpop.trf.xlu0
          %v1044 = vpop.trf.xlu0
          %v1045 = vpop.trf.xlu0
          %v1046 = vpop.trf.xlu0
          %v1047 = vpop.trf.xlu0
          %v1048 = vpop.trf.xlu0
          %v1049 = vpop.trf.xlu0
          %v1050 = vpop.trf.xlu0
          %v1051 = vpop.trf.xlu0
          %v1053 = vsel %vm867, %v1036, 0
          %1055 = vmatpush.msra.mxu0 0.0
          %1056 = vmatpush.msra.mxu0 0.0
          %1057 = vmatpush.msra.mxu0 0.0
          %1058 = vmatpush.msra.mxu0 0.0
          %1059 = vmatpush.msra.mxu0 0.0
          %1060 = vmatpush.msra.mxu0 0.0
          %1061 = vmatpush.msra.mxu0 0.0
          %1062 = vmatpush.msra.mxu0 0.0
          %1063 = vmatpush.msra.mxu0 0.0
          %1064 = vmatpush.msra.mxu0 0.0
          %1065 = vmatpush.msra.mxu0 0.0
          %1066 = vmatpush.msra.mxu0 0.0
          %1067 = vmatpush.msra.mxu0 0.0
          %1068 = vmatpush.msra.mxu0 0.0
          %1069 = vmatpush.msra.mxu0 0.0
          %1070 = vmatpush.msra.mxu0 %v873
          %1071 = vmatmul.f32.gmra.mxu0 %v1053
          %v1072 = vpop.f32.mrf.mxu0
          %v1073 = vadd.f32 0.0, %v1072
          %1074 = vdwg.mxu0
          %v1075 = vld [vmem:[#allocation7] sm:$0xff]
          %v1076 = vmul.f32 %v1075, %v1073
          %1077 = vst [vmem:[#allocation7] sm:$0xff] %v1076
        $region64: #{tpu_custom_call.1} parent=51 // pred_fallthru
          _
        // Predicated region
        $region65: #{tpu_custom_call.1} parent=51 // pred_check
          %p1078 = pneg %p217
        $region66: #{tpu_custom_call.1} parent=51 // pred_check_branch
          %1080 = sbr.rel (%p1078) target = $region68
        $region67: #{tpu_custom_call.1} parent=51 // pred_region
          %1082 = vsyncadd [#allocation6], 0
          %s1084 = sshll.u32 [#allocation7], 4
          %s1085 = int_to_ptr.vmem [resolvable:$true] %s1084
          %s1086 = sshll.u32 %s8, 4
          %s1087 = int_to_ptr.hbm [resolvable:$true] %s1086
          %1089 = dma.vmem_to_hbm [thread:$0]  %s1085, 128, %s1087, [#allocation6]
        $region68: #{tpu_custom_call.1} parent=51 // pred_fallthru
          _
        // Predicated region
        $region69: #{tpu_custom_call.1} parent=51 // pred_check
          %p1090 = pneg %p217
        $region70: #{tpu_custom_call.1} parent=51 // pred_check_branch
          %1092 = sbr.rel (%p1090) target = $region72
        $region71: #{tpu_custom_call.1} parent=51 // pred_region
          %1094 = dma.done [#allocation6], 128
        $region72: #{tpu_custom_call.1} parent=51 // pred_fallthru
          _
      $region52: #{tpu_custom_call.1} parent=5 // pred_fallthru
        _
      %p1095 = scmp.le.s32.totalorder 2, %s16
      // Predicated region
      $region73: #{tpu_custom_call.1} parent=5 // pred_check
        %p1096 = pneg %p1095
      $region74: #{tpu_custom_call.1} parent=5 // pred_check_branch
        %1098 = sbr.rel (%p1096) target = $region76
      $region75: #{tpu_custom_call.1} parent=5 // pred_region
        %s1099 = ssub.s32 %s16, 2
      $region76: #{tpu_custom_call.1} parent=5 // pred_fallthru
        _
    $region6: #{tpu_custom_call.1} parent=1 // loop_footer
      %s20 = sadd.s32 1, %s16
    $region7: #{tpu_custom_call.1} parent=1 // loop_footer_branch
      %15 = sbr.rel target = $region3
    $region8: #{tpu_custom_call.1} parent=1 // loop_exit
      _
    %1100 = vsyncpa [#allocation5], 1
    %s1101 = scalar_lea.sflag [#allocation5], 1
    %1102 = vsyncpa %s1101, 1
    %1103 = vsyncpa [#allocation6], 1
    %s1104 = scalar_lea.sflag [#allocation6], 1
    %1105 = vsyncpa %s1104, 1

</llo_original>
